<compile_context>
chip_gen: v7x
topology: tpu7x:2x2x1
jax: 0.10.0
libtpu: 0.0.40
codegen_flags: <defaults>
</compile_context>

<pallas_src>
import jax
import jax.numpy as jnp
from jax import lax
from jax.experimental import pallas as pl
from jax.experimental.pallas import tpu as pltpu


# Offsets into the flat packed parameter vector (PyTorch (out, in) row-major).
_OFF_W1, _OFF_B1 = 0, 8      # fc1: (4,2) weight, (4,) bias
_OFF_W2, _OFF_B2 = 12, 28    # fc2: (4,4) weight, (4,) bias
_OFF_W3, _OFF_B3 = 32, 48    # fc3: (4,4) weight, (4,) bias
_OFF_W4, _OFF_B4 = 52, 56    # fc4: (1,4) weight, (1,) bias
_N_PARAMS = 57

_LANES = 128          # vreg lane width
_CHUNK_ROWS = 16      # sublane rows per inner-loop step (2 f32 vregs per array)
_TARGET_ROWS = 1024   # sublane rows per grid step (~128K batch elems, ~1.5 MiB block)


def _round_up(x, m):
    return ((x + m - 1) // m) * m


def _choose_tiling(batch):
    """Static (Python-int) tiling: returns (tile_rows per block, total rows)."""
    rows = _round_up(max(-(-batch // _LANES), 1), _CHUNK_ROWS)
    if rows >= 2 * _CHUNK_ROWS:
        # Prefer >= 2 grid steps so both TensorCores get work on v7x.
        half = _round_up(-(-rows // 2), _CHUNK_ROWS)
        tile_rows = min(_TARGET_ROWS, half)
    else:
        tile_rows = rows
    total_rows = _round_up(rows, tile_rows)
    return tile_rows, total_rows


def _mlp_kernel(p_ref, x_ref, o_ref):
    # p_ref : SMEM (57,) f32        -- all weights & biases (scalar-prefetched)
    # x_ref : VMEM (2, S, 128) f32  -- batch on (sublane, lane); 2 feature rows
    # o_ref : VMEM (S, 128) f32
    # Hoist all 57 parameter scalars once (cheap SMEM reads), outside the loop.
    w = [p_ref[i] for i in range(_N_PARAMS)]

    def dense(rows, w_off, b_off, n_in, n_out, relu):
        # rows: list of n_in arrays of shape (_CHUNK_ROWS, 128)
        outs = []
        for o in range(n_out):
            acc = w[w_off + o * n_in] * rows[0]
            for i in range(1, n_in):
                acc = acc + w[w_off + o * n_in + i] * rows[i]
            acc = acc + w[b_off + o]
            if relu:
                acc = jnp.maximum(acc, 0.0)
            outs.append(acc)
        return outs

    n_chunks = o_ref.shape[0] // _CHUNK_ROWS

    def body(c, carry):
        off = pl.multiple_of(c * _CHUNK_ROWS, _CHUNK_ROWS)
        xc = x_ref[:, pl.ds(off, _CHUNK_ROWS), :]     # (2, CHUNK, 128), vreg-resident
        h = [xc[0], xc[1]]
        h = dense(h, _OFF_W1, _OFF_B1, 2, 4, True)
        h = dense(h, _OFF_W2, _OFF_B2, 4, 4, True)
        h = dense(h, _OFF_W3, _OFF_B3, 4, 4, True)
        h = dense(h, _OFF_W4, _OFF_B4, 4, 1, False)
        o_ref[pl.ds(off, _CHUNK_ROWS), :] = jnp.tanh(h[0])
        return carry

    lax.fori_loop(0, n_chunks, body, 0)


def pack_params(params):
    """Flatten all weights/biases (PyTorch (out,in) convention) to one f32 vector."""
    flat = jnp.concatenate([
        params["fc1.weight"].reshape(-1), params["fc1.bias"].reshape(-1),
        params["fc2.weight"].reshape(-1), params["fc2.bias"].reshape(-1),
        params["fc3.weight"].reshape(-1), params["fc3.bias"].reshape(-1),
        params["fc4.weight"].reshape(-1), params["fc4.bias"].reshape(-1),
    ]).astype(jnp.float32)
    assert flat.shape == (_N_PARAMS,), flat.shape
    return flat


@jax.jit
def _forward_packed(x, packed):
    """x: (B, 2) f32; packed: (57,) f32 parameter vector."""
    batch = x.shape[0]
    tile_rows, total_rows = _choose_tiling(batch)
    b_pad = total_rows * _LANES

    # One fused pad + transpose + reshape into the (2, rows, 128) kernel layout.
    x_t = jnp.zeros((2, b_pad), jnp.float32).at[:, :batch].set(
        x.astype(jnp.float32).T)
    x_t = x_t.reshape(2, total_rows, _LANES)

    grid = (total_rows // tile_rows,)

    out = pl.pallas_call(
        _mlp_kernel,
        out_shape=jax.ShapeDtypeStruct((total_rows, _LANES), jnp.float32),
        grid_spec=pltpu.PrefetchScalarGridSpec(
            num_scalar_prefetch=1,                              # params -> SMEM
            grid=grid,
            in_specs=[pl.BlockSpec((2, tile_rows, _LANES),
                                   lambda i, p: (0, i, 0))],
            out_specs=pl.BlockSpec((tile_rows, _LANES),
                                   lambda i, p: (i, 0)),
        ),
        compiler_params=pltpu.CompilerParams(
            dimension_semantics=("parallel",)),
        cost_estimate=pl.CostEstimate(
            flops=100 * b_pad,
            transcendentals=b_pad,
            bytes_accessed=12 * b_pad + 4 * _N_PARAMS),
    )(packed, x_t)

    # Back to the PyTorch output layout (B, 1); padded lanes are sliced off.
    return out.reshape(-1)[:batch].reshape(batch, 1)


def learner_fc_nets2_forward(x, params):
    """Convenience wrapper; for hot loops, pack once and call _forward_packed."""
    return _forward_packed(x, pack_params(params))


def init_params(key):
    """Deterministic init mirroring nn.Linear default: U(-1/sqrt(fan_in), +1/sqrt(fan_in))."""
    shapes = {
        "fc1": (4, 2),
        "fc2": (4, 4),
        "fc3": (4, 4),
        "fc4": (1, 4),
    }
    params = {}
    for name, (out_f, in_f) in shapes.items():
        key, kw, kb = jax.random.split(key, 3)
        bound = 1.0 / jnp.sqrt(float(in_f))
        params[f"{name}.weight"] = jax.random.uniform(
            kw, (out_f, in_f), jnp.float32, minval=-bound, maxval=bound)
        params[f"{name}.bias"] = jax.random.uniform(
            kb, (out_f,), jnp.float32, minval=-bound, maxval=bound)
    return params


def _reference_forward(x, params):
    """Plain-JAX reference of the PyTorch forward pass."""
    h = jnp.maximum(x @ params["fc1.weight"].T + params["fc1.bias"], 0.0)
    h = jnp.maximum(h @ params["fc2.weight"].T + params["fc2.bias"], 0.0)
    h = jnp.maximum(h @ params["fc3.weight"].T + params["fc3.bias"], 0.0)
    return jnp.tanh(h @ params["fc4.weight"].T + params["fc4.bias"])


if __name__ == "__main__":
    key = jax.random.PRNGKey(0)
    key, kx = jax.random.split(key)

    B = 8  # small batch; inputs are real numbers in [-1, 1]
    x = jax.random.uniform(kx, (B, 2), jnp.float32, minval=-1.0, maxval=1.0)

    params = init_params(key)

    packed = pack_params(params)            # pack once, reuse across calls
    out = _forward_packed(x, packed)
    out = jax.block_until_ready(out)

    ref = _reference_forward(x, params)
    assert out.shape == (B, 1), out.shape
    assert jnp.allclose(out, ref, atol=1e-5, rtol=1e-5), (out, ref)

    print("KERNEL_OK")
</pallas_src>

<mosaic_0001>
module attributes {stable_mosaic.version = 11 : i64} {
  func.func @_mlp_kernel(%arg0: i32, %arg1: memref<57xf32, #tpu.memory_space<smem>>, %arg2: memref<2x16x128xf32, #tpu.memory_space<vmem>>, %arg3: memref<16x128xf32, #tpu.memory_space<vmem>>) attributes {dimension_semantics = [#tpu.dimension_semantics<parallel>], iteration_bounds = array<i64: 1>, scalar_prefetch = 1 : i64, scratch_operands = 0 : i64, tpu.core_type = #tpu.core_type<tc>, window_params = [{transform_indices = @transform_0, window_bounds = array<i64: 2, 16, 128>}, {transform_indices = @transform_1, window_bounds = array<i64: 16, 128>}]} {
    %c0 = arith.constant 0 : index
    %0 = memref.load %arg1[%c0] : memref<57xf32, #tpu.memory_space<smem>>
    %c1 = arith.constant 1 : index
    %1 = memref.load %arg1[%c1] : memref<57xf32, #tpu.memory_space<smem>>
    %c2 = arith.constant 2 : index
    %2 = memref.load %arg1[%c2] : memref<57xf32, #tpu.memory_space<smem>>
    %c3 = arith.constant 3 : index
    %3 = memref.load %arg1[%c3] : memref<57xf32, #tpu.memory_space<smem>>
    %c4 = arith.constant 4 : index
    %4 = memref.load %arg1[%c4] : memref<57xf32, #tpu.memory_space<smem>>
    %c5 = arith.constant 5 : index
    %5 = memref.load %arg1[%c5] : memref<57xf32, #tpu.memory_space<smem>>
    %c6 = arith.constant 6 : index
    %6 = memref.load %arg1[%c6] : memref<57xf32, #tpu.memory_space<smem>>
    %c7 = arith.constant 7 : index
    %7 = memref.load %arg1[%c7] : memref<57xf32, #tpu.memory_space<smem>>
    %c8 = arith.constant 8 : index
    %8 = memref.load %arg1[%c8] : memref<57xf32, #tpu.memory_space<smem>>
    %c9 = arith.constant 9 : index
    %9 = memref.load %arg1[%c9] : memref<57xf32, #tpu.memory_space<smem>>
    %c10 = arith.constant 10 : index
    %10 = memref.load %arg1[%c10] : memref<57xf32, #tpu.memory_space<smem>>
    %c11 = arith.constant 11 : index
    %11 = memref.load %arg1[%c11] : memref<57xf32, #tpu.memory_space<smem>>
    %c12 = arith.constant 12 : index
    %12 = memref.load %arg1[%c12] : memref<57xf32, #tpu.memory_space<smem>>
    %c13 = arith.constant 13 : index
    %13 = memref.load %arg1[%c13] : memref<57xf32, #tpu.memory_space<smem>>
    %c14 = arith.constant 14 : index
    %14 = memref.load %arg1[%c14] : memref<57xf32, #tpu.memory_space<smem>>
    %c15 = arith.constant 15 : index
    %15 = memref.load %arg1[%c15] : memref<57xf32, #tpu.memory_space<smem>>
    %c16 = arith.constant 16 : index
    %16 = memref.load %arg1[%c16] : memref<57xf32, #tpu.memory_space<smem>>
    %c17 = arith.constant 17 : index
    %17 = memref.load %arg1[%c17] : memref<57xf32, #tpu.memory_space<smem>>
    %c18 = arith.constant 18 : index
    %18 = memref.load %arg1[%c18] : memref<57xf32, #tpu.memory_space<smem>>
    %c19 = arith.constant 19 : index
    %19 = memref.load %arg1[%c19] : memref<57xf32, #tpu.memory_space<smem>>
    %c20 = arith.constant 20 : index
    %20 = memref.load %arg1[%c20] : memref<57xf32, #tpu.memory_space<smem>>
    %c21 = arith.constant 21 : index
    %21 = memref.load %arg1[%c21] : memref<57xf32, #tpu.memory_space<smem>>
    %c22 = arith.constant 22 : index
    %22 = memref.load %arg1[%c22] : memref<57xf32, #tpu.memory_space<smem>>
    %c23 = arith.constant 23 : index
    %23 = memref.load %arg1[%c23] : memref<57xf32, #tpu.memory_space<smem>>
    %c24 = arith.constant 24 : index
    %24 = memref.load %arg1[%c24] : memref<57xf32, #tpu.memory_space<smem>>
    %c25 = arith.constant 25 : index
    %25 = memref.load %arg1[%c25] : memref<57xf32, #tpu.memory_space<smem>>
    %c26 = arith.constant 26 : index
    %26 = memref.load %arg1[%c26] : memref<57xf32, #tpu.memory_space<smem>>
    %c27 = arith.constant 27 : index
    %27 = memref.load %arg1[%c27] : memref<57xf32, #tpu.memory_space<smem>>
    %c28 = arith.constant 28 : index
    %28 = memref.load %arg1[%c28] : memref<57xf32, #tpu.memory_space<smem>>
    %c29 = arith.constant 29 : index
    %29 = memref.load %arg1[%c29] : memref<57xf32, #tpu.memory_space<smem>>
    %c30 = arith.constant 30 : index
    %30 = memref.load %arg1[%c30] : memref<57xf32, #tpu.memory_space<smem>>
    %c31 = arith.constant 31 : index
    %31 = memref.load %arg1[%c31] : memref<57xf32, #tpu.memory_space<smem>>
    %c32 = arith.constant 32 : index
    %32 = memref.load %arg1[%c32] : memref<57xf32, #tpu.memory_space<smem>>
    %c33 = arith.constant 33 : index
    %33 = memref.load %arg1[%c33] : memref<57xf32, #tpu.memory_space<smem>>
    %c34 = arith.constant 34 : index
    %34 = memref.load %arg1[%c34] : memref<57xf32, #tpu.memory_space<smem>>
    %c35 = arith.constant 35 : index
    %35 = memref.load %arg1[%c35] : memref<57xf32, #tpu.memory_space<smem>>
    %c36 = arith.constant 36 : index
    %36 = memref.load %arg1[%c36] : memref<57xf32, #tpu.memory_space<smem>>
    %c37 = arith.constant 37 : index
    %37 = memref.load %arg1[%c37] : memref<57xf32, #tpu.memory_space<smem>>
    %c38 = arith.constant 38 : index
    %38 = memref.load %arg1[%c38] : memref<57xf32, #tpu.memory_space<smem>>
    %c39 = arith.constant 39 : index
    %39 = memref.load %arg1[%c39] : memref<57xf32, #tpu.memory_space<smem>>
    %c40 = arith.constant 40 : index
    %40 = memref.load %arg1[%c40] : memref<57xf32, #tpu.memory_space<smem>>
    %c41 = arith.constant 41 : index
    %41 = memref.load %arg1[%c41] : memref<57xf32, #tpu.memory_space<smem>>
    %c42 = arith.constant 42 : index
    %42 = memref.load %arg1[%c42] : memref<57xf32, #tpu.memory_space<smem>>
    %c43 = arith.constant 43 : index
    %43 = memref.load %arg1[%c43] : memref<57xf32, #tpu.memory_space<smem>>
    %c44 = arith.constant 44 : index
    %44 = memref.load %arg1[%c44] : memref<57xf32, #tpu.memory_space<smem>>
    %c45 = arith.constant 45 : index
    %45 = memref.load %arg1[%c45] : memref<57xf32, #tpu.memory_space<smem>>
    %c46 = arith.constant 46 : index
    %46 = memref.load %arg1[%c46] : memref<57xf32, #tpu.memory_space<smem>>
    %c47 = arith.constant 47 : index
    %47 = memref.load %arg1[%c47] : memref<57xf32, #tpu.memory_space<smem>>
    %c48 = arith.constant 48 : index
    %48 = memref.load %arg1[%c48] : memref<57xf32, #tpu.memory_space<smem>>
    %c49 = arith.constant 49 : index
    %49 = memref.load %arg1[%c49] : memref<57xf32, #tpu.memory_space<smem>>
    %c50 = arith.constant 50 : index
    %50 = memref.load %arg1[%c50] : memref<57xf32, #tpu.memory_space<smem>>
    %c51 = arith.constant 51 : index
    %51 = memref.load %arg1[%c51] : memref<57xf32, #tpu.memory_space<smem>>
    %c52 = arith.constant 52 : index
    %52 = memref.load %arg1[%c52] : memref<57xf32, #tpu.memory_space<smem>>
    %c53 = arith.constant 53 : index
    %53 = memref.load %arg1[%c53] : memref<57xf32, #tpu.memory_space<smem>>
    %c54 = arith.constant 54 : index
    %54 = memref.load %arg1[%c54] : memref<57xf32, #tpu.memory_space<smem>>
    %c55 = arith.constant 55 : index
    %55 = memref.load %arg1[%c55] : memref<57xf32, #tpu.memory_space<smem>>
    %c56 = arith.constant 56 : index
    %56 = memref.load %arg1[%c56] : memref<57xf32, #tpu.memory_space<smem>>
    %c0_i32 = arith.constant 0 : i32
    %c16_i32 = arith.constant 16 : i32
    %57 = arith.muli %c0_i32, %c16_i32 : i32
    %58 = tpu.assume_multiple %57, 16 : i32
    %c0_0 = arith.constant 0 : index
    %59 = arith.index_cast %58 : i32 to index
    %c0_1 = arith.constant 0 : index
    %60 = vector.load %arg2[%c0_0, %59, %c0_1] : memref<2x16x128xf32, #tpu.memory_space<vmem>>, vector<2x16x128xf32>
    %61 = vector.extract_strided_slice %60 {offsets = [0, 0, 0], sizes = [1, 16, 128], strides = [1, 1, 1]} : vector<2x16x128xf32> to vector<1x16x128xf32>
    %62 = vector.shape_cast %61 : vector<1x16x128xf32> to vector<16x128xf32>
    %63 = vector.extract_strided_slice %60 {offsets = [1, 0, 0], sizes = [1, 16, 128], strides = [1, 1, 1]} : vector<2x16x128xf32> to vector<1x16x128xf32>
    %64 = vector.shape_cast %63 : vector<1x16x128xf32> to vector<16x128xf32>
    %65 = vector.broadcast %0 : f32 to vector<16x128xf32>
    %66 = arith.mulf %65, %62 : vector<16x128xf32>
    %67 = vector.broadcast %1 : f32 to vector<16x128xf32>
    %68 = arith.mulf %67, %64 : vector<16x128xf32>
    %69 = arith.addf %66, %68 : vector<16x128xf32>
    %70 = vector.broadcast %8 : f32 to vector<16x128xf32>
    %71 = arith.addf %69, %70 : vector<16x128xf32>
    %cst = arith.constant 0.000000e+00 : f32
    %72 = vector.broadcast %cst : f32 to vector<16x128xf32>
    %73 = arith.maximumf %71, %72 : vector<16x128xf32>
    %74 = vector.broadcast %2 : f32 to vector<16x128xf32>
    %75 = arith.mulf %74, %62 : vector<16x128xf32>
    %76 = vector.broadcast %3 : f32 to vector<16x128xf32>
    %77 = arith.mulf %76, %64 : vector<16x128xf32>
    %78 = arith.addf %75, %77 : vector<16x128xf32>
    %79 = vector.broadcast %9 : f32 to vector<16x128xf32>
    %80 = arith.addf %78, %79 : vector<16x128xf32>
    %cst_2 = arith.constant 0.000000e+00 : f32
    %81 = vector.broadcast %cst_2 : f32 to vector<16x128xf32>
    %82 = arith.maximumf %80, %81 : vector<16x128xf32>
    %83 = vector.broadcast %4 : f32 to vector<16x128xf32>
    %84 = arith.mulf %83, %62 : vector<16x128xf32>
    %85 = vector.broadcast %5 : f32 to vector<16x128xf32>
    %86 = arith.mulf %85, %64 : vector<16x128xf32>
    %87 = arith.addf %84, %86 : vector<16x128xf32>
    %88 = vector.broadcast %10 : f32 to vector<16x128xf32>
    %89 = arith.addf %87, %88 : vector<16x128xf32>
    %cst_3 = arith.constant 0.000000e+00 : f32
    %90 = vector.broadcast %cst_3 : f32 to vector<16x128xf32>
    %91 = arith.maximumf %89, %90 : vector<16x128xf32>
    %92 = vector.broadcast %6 : f32 to vector<16x128xf32>
    %93 = arith.mulf %92, %62 : vector<16x128xf32>
    %94 = vector.broadcast %7 : f32 to vector<16x128xf32>
    %95 = arith.mulf %94, %64 : vector<16x128xf32>
    %96 = arith.addf %93, %95 : vector<16x128xf32>
    %97 = vector.broadcast %11 : f32 to vector<16x128xf32>
    %98 = arith.addf %96, %97 : vector<16x128xf32>
    %cst_4 = arith.constant 0.000000e+00 : f32
    %99 = vector.broadcast %cst_4 : f32 to vector<16x128xf32>
    %100 = arith.maximumf %98, %99 : vector<16x128xf32>
    %101 = vector.broadcast %12 : f32 to vector<16x128xf32>
    %102 = arith.mulf %101, %73 : vector<16x128xf32>
    %103 = vector.broadcast %13 : f32 to vector<16x128xf32>
    %104 = arith.mulf %103, %82 : vector<16x128xf32>
    %105 = arith.addf %102, %104 : vector<16x128xf32>
    %106 = vector.broadcast %14 : f32 to vector<16x128xf32>
    %107 = arith.mulf %106, %91 : vector<16x128xf32>
    %108 = arith.addf %105, %107 : vector<16x128xf32>
    %109 = vector.broadcast %15 : f32 to vector<16x128xf32>
    %110 = arith.mulf %109, %100 : vector<16x128xf32>
    %111 = arith.addf %108, %110 : vector<16x128xf32>
    %112 = vector.broadcast %28 : f32 to vector<16x128xf32>
    %113 = arith.addf %111, %112 : vector<16x128xf32>
    %cst_5 = arith.constant 0.000000e+00 : f32
    %114 = vector.broadcast %cst_5 : f32 to vector<16x128xf32>
    %115 = arith.maximumf %113, %114 : vector<16x128xf32>
    %116 = vector.broadcast %16 : f32 to vector<16x128xf32>
    %117 = arith.mulf %116, %73 : vector<16x128xf32>
    %118 = vector.broadcast %17 : f32 to vector<16x128xf32>
    %119 = arith.mulf %118, %82 : vector<16x128xf32>
    %120 = arith.addf %117, %119 : vector<16x128xf32>
    %121 = vector.broadcast %18 : f32 to vector<16x128xf32>
    %122 = arith.mulf %121, %91 : vector<16x128xf32>
    %123 = arith.addf %120, %122 : vector<16x128xf32>
    %124 = vector.broadcast %19 : f32 to vector<16x128xf32>
    %125 = arith.mulf %124, %100 : vector<16x128xf32>
    %126 = arith.addf %123, %125 : vector<16x128xf32>
    %127 = vector.broadcast %29 : f32 to vector<16x128xf32>
    %128 = arith.addf %126, %127 : vector<16x128xf32>
    %cst_6 = arith.constant 0.000000e+00 : f32
    %129 = vector.broadcast %cst_6 : f32 to vector<16x128xf32>
    %130 = arith.maximumf %128, %129 : vector<16x128xf32>
    %131 = vector.broadcast %20 : f32 to vector<16x128xf32>
    %132 = arith.mulf %131, %73 : vector<16x128xf32>
    %133 = vector.broadcast %21 : f32 to vector<16x128xf32>
    %134 = arith.mulf %133, %82 : vector<16x128xf32>
    %135 = arith.addf %132, %134 : vector<16x128xf32>
    %136 = vector.broadcast %22 : f32 to vector<16x128xf32>
    %137 = arith.mulf %136, %91 : vector<16x128xf32>
    %138 = arith.addf %135, %137 : vector<16x128xf32>
    %139 = vector.broadcast %23 : f32 to vector<16x128xf32>
    %140 = arith.mulf %139, %100 : vector<16x128xf32>
    %141 = arith.addf %138, %140 : vector<16x128xf32>
    %142 = vector.broadcast %30 : f32 to vector<16x128xf32>
    %143 = arith.addf %141, %142 : vector<16x128xf32>
    %cst_7 = arith.constant 0.000000e+00 : f32
    %144 = vector.broadcast %cst_7 : f32 to vector<16x128xf32>
    %145 = arith.maximumf %143, %144 : vector<16x128xf32>
    %146 = vector.broadcast %24 : f32 to vector<16x128xf32>
    %147 = arith.mulf %146, %73 : vector<16x128xf32>
    %148 = vector.broadcast %25 : f32 to vector<16x128xf32>
    %149 = arith.mulf %148, %82 : vector<16x128xf32>
    %150 = arith.addf %147, %149 : vector<16x128xf32>
    %151 = vector.broadcast %26 : f32 to vector<16x128xf32>
    %152 = arith.mulf %151, %91 : vector<16x128xf32>
    %153 = arith.addf %150, %152 : vector<16x128xf32>
    %154 = vector.broadcast %27 : f32 to vector<16x128xf32>
    %155 = arith.mulf %154, %100 : vector<16x128xf32>
    %156 = arith.addf %153, %155 : vector<16x128xf32>
    %157 = vector.broadcast %31 : f32 to vector<16x128xf32>
    %158 = arith.addf %156, %157 : vector<16x128xf32>
    %cst_8 = arith.constant 0.000000e+00 : f32
    %159 = vector.broadcast %cst_8 : f32 to vector<16x128xf32>
    %160 = arith.maximumf %158, %159 : vector<16x128xf32>
    %161 = vector.broadcast %32 : f32 to vector<16x128xf32>
    %162 = arith.mulf %161, %115 : vector<16x128xf32>
    %163 = vector.broadcast %33 : f32 to vector<16x128xf32>
    %164 = arith.mulf %163, %130 : vector<16x128xf32>
    %165 = arith.addf %162, %164 : vector<16x128xf32>
    %166 = vector.broadcast %34 : f32 to vector<16x128xf32>
    %167 = arith.mulf %166, %145 : vector<16x128xf32>
    %168 = arith.addf %165, %167 : vector<16x128xf32>
    %169 = vector.broadcast %35 : f32 to vector<16x128xf32>
    %170 = arith.mulf %169, %160 : vector<16x128xf32>
    %171 = arith.addf %168, %170 : vector<16x128xf32>
    %172 = vector.broadcast %48 : f32 to vector<16x128xf32>
    %173 = arith.addf %171, %172 : vector<16x128xf32>
    %cst_9 = arith.constant 0.000000e+00 : f32
    %174 = vector.broadcast %cst_9 : f32 to vector<16x128xf32>
    %175 = arith.maximumf %173, %174 : vector<16x128xf32>
    %176 = vector.broadcast %36 : f32 to vector<16x128xf32>
    %177 = arith.mulf %176, %115 : vector<16x128xf32>
    %178 = vector.broadcast %37 : f32 to vector<16x128xf32>
    %179 = arith.mulf %178, %130 : vector<16x128xf32>
    %180 = arith.addf %177, %179 : vector<16x128xf32>
    %181 = vector.broadcast %38 : f32 to vector<16x128xf32>
    %182 = arith.mulf %181, %145 : vector<16x128xf32>
    %183 = arith.addf %180, %182 : vector<16x128xf32>
    %184 = vector.broadcast %39 : f32 to vector<16x128xf32>
    %185 = arith.mulf %184, %160 : vector<16x128xf32>
    %186 = arith.addf %183, %185 : vector<16x128xf32>
    %187 = vector.broadcast %49 : f32 to vector<16x128xf32>
    %188 = arith.addf %186, %187 : vector<16x128xf32>
    %cst_10 = arith.constant 0.000000e+00 : f32
    %189 = vector.broadcast %cst_10 : f32 to vector<16x128xf32>
    %190 = arith.maximumf %188, %189 : vector<16x128xf32>
    %191 = vector.broadcast %40 : f32 to vector<16x128xf32>
    %192 = arith.mulf %191, %115 : vector<16x128xf32>
    %193 = vector.broadcast %41 : f32 to vector<16x128xf32>
    %194 = arith.mulf %193, %130 : vector<16x128xf32>
    %195 = arith.addf %192, %194 : vector<16x128xf32>
    %196 = vector.broadcast %42 : f32 to vector<16x128xf32>
    %197 = arith.mulf %196, %145 : vector<16x128xf32>
    %198 = arith.addf %195, %197 : vector<16x128xf32>
    %199 = vector.broadcast %43 : f32 to vector<16x128xf32>
    %200 = arith.mulf %199, %160 : vector<16x128xf32>
    %201 = arith.addf %198, %200 : vector<16x128xf32>
    %202 = vector.broadcast %50 : f32 to vector<16x128xf32>
    %203 = arith.addf %201, %202 : vector<16x128xf32>
    %cst_11 = arith.constant 0.000000e+00 : f32
    %204 = vector.broadcast %cst_11 : f32 to vector<16x128xf32>
    %205 = arith.maximumf %203, %204 : vector<16x128xf32>
    %206 = vector.broadcast %44 : f32 to vector<16x128xf32>
    %207 = arith.mulf %206, %115 : vector<16x128xf32>
    %208 = vector.broadcast %45 : f32 to vector<16x128xf32>
    %209 = arith.mulf %208, %130 : vector<16x128xf32>
    %210 = arith.addf %207, %209 : vector<16x128xf32>
    %211 = vector.broadcast %46 : f32 to vector<16x128xf32>
    %212 = arith.mulf %211, %145 : vector<16x128xf32>
    %213 = arith.addf %210, %212 : vector<16x128xf32>
    %214 = vector.broadcast %47 : f32 to vector<16x128xf32>
    %215 = arith.mulf %214, %160 : vector<16x128xf32>
    %216 = arith.addf %213, %215 : vector<16x128xf32>
    %217 = vector.broadcast %51 : f32 to vector<16x128xf32>
    %218 = arith.addf %216, %217 : vector<16x128xf32>
    %cst_12 = arith.constant 0.000000e+00 : f32
    %219 = vector.broadcast %cst_12 : f32 to vector<16x128xf32>
    %220 = arith.maximumf %218, %219 : vector<16x128xf32>
    %221 = vector.broadcast %52 : f32 to vector<16x128xf32>
    %222 = arith.mulf %221, %175 : vector<16x128xf32>
    %223 = vector.broadcast %53 : f32 to vector<16x128xf32>
    %224 = arith.mulf %223, %190 : vector<16x128xf32>
    %225 = arith.addf %222, %224 : vector<16x128xf32>
    %226 = vector.broadcast %54 : f32 to vector<16x128xf32>
    %227 = arith.mulf %226, %205 : vector<16x128xf32>
    %228 = arith.addf %225, %227 : vector<16x128xf32>
    %229 = vector.broadcast %55 : f32 to vector<16x128xf32>
    %230 = arith.mulf %229, %220 : vector<16x128xf32>
    %231 = arith.addf %228, %230 : vector<16x128xf32>
    %232 = vector.broadcast %56 : f32 to vector<16x128xf32>
    %233 = arith.addf %231, %232 : vector<16x128xf32>
    %234 = math.tanh %233 : vector<16x128xf32>
    %235 = arith.index_cast %58 : i32 to index
    %c0_13 = arith.constant 0 : index
    %236 = vector.load %arg3[%235, %c0_13] : memref<16x128xf32, #tpu.memory_space<vmem>>, vector<16x128xf32>
    tpu.vector_store %arg3[%235, %c0_13], %234 {strides = array<i32>} : memref<16x128xf32, #tpu.memory_space<vmem>>, vector<16x128xf32>,
    %c1_i32 = arith.constant 1 : i32
    return
  }
  func.func @transform_0(%arg0: i32, %arg1: memref<57xf32, #tpu.memory_space<smem>>) -> (i32, i32, i32) {
    %c0_i32 = arith.constant 0 : i32
    %c0_i32_0 = arith.constant 0 : i32
    %c0_i32_1 = arith.constant 0 : i32
    return %c0_i32, %arg0, %c0_i32_0 : i32, i32, i32
  }
  func.func @transform_1(%arg0: i32, %arg1: memref<57xf32, #tpu.memory_space<smem>>) -> (i32, i32) {
    %c0_i32 = arith.constant 0 : i32
    %c0_i32_0 = arith.constant 0 : i32
    return %arg0, %c0_i32 : i32, i32
  }
}

</mosaic_0001>

<llo_original>
// kernel: _forward_packed.1
$region0: #{_forward_packed.1}
  #allocation0 [shape = 'u32[]', space=smem, size = 0x4, offset = 0x4, fixed_abs, tag = 'smem constant byte address 0x4 - core index']
  #allocation1 [shape = 'u32[144,128]{1,0:T(1,128)}', space=vmem, size = 0x12000, scoped, tag = 'internal scratch']
  #allocation2 [shape = 's32[1]{0}', space=sflag, size = 0x4, scoped, tag = 'scoped memory for _forward_packed.1']
  #allocation3 [shape = 'u8[512]{0}', space=smem, size = 0x200, scoped, tag = 'prefetched SMEM operand 0']
  %s0 = inlined_call_operand.vmem [shape: f32[57], index: 0, kind: input, shape index: {}]
  %s1 = inlined_call_operand.vmem [shape: f32[2,16,128], index: 1, kind: input, shape index: {}]
  %s2 = inlined_call_operand.vmem [shape: f32[16,128], index: 2, kind: output, shape index: {}]
  %s3 = sld [smem:[#allocation0]]
  $region14: #{_forward_packed.1} parent=0
    _
  %s5 = ssub.s32 1, %s3
  %s6 = scalar_select 0, %s5, %s3
  %s7 = sshll.u32 %s0, 4
  %s8 = int_to_ptr.vmem [resolvable:$true] %s7
  %10 = dma.vmem_to_smem %s8, 16, [#allocation3], [#allocation2]
  %11 = dma.done [#allocation2], 16
  %12 = sfence
  // Predicated region
  $region2: #{_forward_packed.1} parent=0 // pred_check
    _
  $region3: #{_forward_packed.1} parent=0 // pred_check_branch
    %14 = sbr.rel (0) target = $region5
  $region4: #{_forward_packed.1} parent=0 // pred_region
    _
  $region5: #{_forward_packed.1} parent=0 // pred_fallthru
    _
  %s15 = sld [smem:[#allocation3]]
  %s16 = sld [smem:[#allocation3 + $0x1]]
  %s17 = sld [smem:[#allocation3 + $0x2]]
  %s18 = sld [smem:[#allocation3 + $0x3]]
  %s19 = sld [smem:[#allocation3 + $0x4]]
  %s20 = sld [smem:[#allocation3 + $0x5]]
  %s21 = sld [smem:[#allocation3 + $0x6]]
  %s22 = sld [smem:[#allocation3 + $0x7]]
  %s23 = sld [smem:[#allocation3 + $0x8]]
  %s24 = sld [smem:[#allocation3 + $0x9]]
  %s25 = sld [smem:[#allocation3 + $0xa]]
  %s26 = sld [smem:[#allocation3 + $0xb]]
  %s27 = sld [smem:[#allocation3 + $0xc]]
  %s28 = sld [smem:[#allocation3 + $0xd]]
  %s29 = sld [smem:[#allocation3 + $0xe]]
  %s30 = sld [smem:[#allocation3 + $0xf]]
  %s31 = sld [smem:[#allocation3 + $0x10]]
  %s32 = sld [smem:[#allocation3 + $0x11]]
  %s33 = sld [smem:[#allocation3 + $0x12]]
  %s34 = sld [smem:[#allocation3 + $0x13]]
  %s35 = sld [smem:[#allocation3 + $0x14]]
  %s36 = sld [smem:[#allocation3 + $0x15]]
  %s37 = sld [smem:[#allocation3 + $0x16]]
  %s38 = sld [smem:[#allocation3 + $0x17]]
  %s39 = sld [smem:[#allocation3 + $0x18]]
  %s40 = sld [smem:[#allocation3 + $0x19]]
  %s41 = sld [smem:[#allocation3 + $0x1a]]
  %s42 = sld [smem:[#allocation3 + $0x1b]]
  %s43 = sld [smem:[#allocation3 + $0x1c]]
  %s44 = sld [smem:[#allocation3 + $0x1d]]
  %s45 = sld [smem:[#allocation3 + $0x1e]]
  %s46 = sld [smem:[#allocation3 + $0x1f]]
  %s47 = sld [smem:[#allocation3 + $0x20]]
  %s48 = sld [smem:[#allocation3 + $0x21]]
  %s49 = sld [smem:[#allocation3 + $0x22]]
  %s50 = sld [smem:[#allocation3 + $0x23]]
  %s51 = sld [smem:[#allocation3 + $0x24]]
  %s52 = sld [smem:[#allocation3 + $0x25]]
  %s53 = sld [smem:[#allocation3 + $0x26]]
  %s54 = sld [smem:[#allocation3 + $0x27]]
  %s55 = sld [smem:[#allocation3 + $0x28]]
  %s56 = sld [smem:[#allocation3 + $0x29]]
  %s57 = sld [smem:[#allocation3 + $0x2a]]
  %s58 = sld [smem:[#allocation3 + $0x2b]]
  %s59 = sld [smem:[#allocation3 + $0x2c]]
  %s60 = sld [smem:[#allocation3 + $0x2d]]
  %s61 = sld [smem:[#allocation3 + $0x2e]]
  %s62 = sld [smem:[#allocation3 + $0x2f]]
  %s63 = sld [smem:[#allocation3 + $0x30]]
  %s64 = sld [smem:[#allocation3 + $0x31]]
  %s65 = sld [smem:[#allocation3 + $0x32]]
  %s66 = sld [smem:[#allocation3 + $0x33]]
  %s67 = sld [smem:[#allocation3 + $0x34]]
  %s68 = sld [smem:[#allocation3 + $0x35]]
  %s69 = sld [smem:[#allocation3 + $0x36]]
  %s70 = sld [smem:[#allocation3 + $0x37]]
  %s71 = sld [smem:[#allocation3 + $0x38]]
  %v72 = vld [vmem:[%s1] sm:$0xff]
  %v73 = vld [vmem:[%s1 + $0x8] sm:$0xff]
  %v74 = vld [vmem:[%s1 + $0x10] sm:$0xff]
  %v75 = vld [vmem:[%s1 + $0x18] sm:$0xff]
  %v76 = vstv %s15
  %v77 = vmul.f32 %v76, %v72
  %v78 = vmul.f32 %v76, %v73
  %v79 = vstv %s16
  %v80 = vmul.f32 %v79, %v74
  %v81 = vmul.f32 %v79, %v75
  %v82 = vadd.f32 %v77, %v80
  %v83 = vadd.f32 %v78, %v81
  %v84 = vstv %s23
  %v85 = vadd.f32 %v82, %v84
  %v86 = vadd.f32 %v83, %v84
  %v87 = vmax.f32 %v85, 0.0
  %v88 = vmax.f32 %v86, 0.0
  %v89 = vstv %s17
  %v90 = vmul.f32 %v89, %v72
  %v91 = vmul.f32 %v89, %v73
  %v92 = vstv %s18
  %v93 = vmul.f32 %v92, %v74
  %v94 = vmul.f32 %v92, %v75
  %v95 = vadd.f32 %v90, %v93
  %v96 = vadd.f32 %v91, %v94
  %v97 = vstv %s24
  %v98 = vadd.f32 %v95, %v97
  %v99 = vadd.f32 %v96, %v97
  %v100 = vmax.f32 %v98, 0.0
  %v101 = vmax.f32 %v99, 0.0
  %v102 = vstv %s19
  %v103 = vmul.f32 %v102, %v72
  %v104 = vmul.f32 %v102, %v73
  %v105 = vstv %s20
  %v106 = vmul.f32 %v105, %v74
  %v107 = vmul.f32 %v105, %v75
  %v108 = vadd.f32 %v103, %v106
  %v109 = vadd.f32 %v104, %v107
  %v110 = vstv %s25
  %v111 = vadd.f32 %v108, %v110
  %v112 = vadd.f32 %v109, %v110
  %v113 = vmax.f32 %v111, 0.0
  %v114 = vmax.f32 %v112, 0.0
  %v115 = vstv %s21
  %v116 = vmul.f32 %v115, %v72
  %v117 = vmul.f32 %v115, %v73
  %v118 = vstv %s22
  %v119 = vmul.f32 %v118, %v74
  %v120 = vmul.f32 %v118, %v75
  %v121 = vadd.f32 %v116, %v119
  %v122 = vadd.f32 %v117, %v120
  %v123 = vstv %s26
  %v124 = vadd.f32 %v121, %v123
  %v125 = vadd.f32 %v122, %v123
  %v126 = vmax.f32 %v124, 0.0
  %v127 = vmax.f32 %v125, 0.0
  %v128 = vstv %s27
  %v129 = vmul.f32 %v128, %v87
  %v130 = vmul.f32 %v128, %v88
  %v131 = vstv %s28
  %v132 = vmul.f32 %v131, %v100
  %v133 = vmul.f32 %v131, %v101
  %v134 = vadd.f32 %v129, %v132
  %v135 = vadd.f32 %v130, %v133
  %v136 = vstv %s29
  %v137 = vmul.f32 %v136, %v113
  %v138 = vmul.f32 %v136, %v114
  %v139 = vadd.f32 %v134, %v137
  %v140 = vadd.f32 %v135, %v138
  %v141 = vstv %s30
  %v142 = vmul.f32 %v141, %v126
  %v143 = vmul.f32 %v141, %v127
  %v144 = vadd.f32 %v139, %v142
  %v145 = vadd.f32 %v140, %v143
  %v146 = vstv %s43
  %v147 = vadd.f32 %v144, %v146
  %v148 = vadd.f32 %v145, %v146
  %v149 = vmax.f32 %v147, 0.0
  %v150 = vmax.f32 %v148, 0.0
  %v151 = vstv %s31
  %v152 = vmul.f32 %v151, %v87
  %v153 = vmul.f32 %v151, %v88
  %v154 = vstv %s32
  %v155 = vmul.f32 %v154, %v100
  %v156 = vmul.f32 %v154, %v101
  %v157 = vadd.f32 %v152, %v155
  %v158 = vadd.f32 %v153, %v156
  %v159 = vstv %s33
  %v160 = vmul.f32 %v159, %v113
  %v161 = vmul.f32 %v159, %v114
  %v162 = vadd.f32 %v157, %v160
  %v163 = vadd.f32 %v158, %v161
  %v164 = vstv %s34
  %v165 = vmul.f32 %v164, %v126
  %v166 = vmul.f32 %v164, %v127
  %v167 = vadd.f32 %v162, %v165
  %v168 = vadd.f32 %v163, %v166
  %v169 = vstv %s44
  %v170 = vadd.f32 %v167, %v169
  %v171 = vadd.f32 %v168, %v169
  %v172 = vmax.f32 %v170, 0.0
  %v173 = vmax.f32 %v171, 0.0
  %v174 = vstv %s35
  %v175 = vmul.f32 %v174, %v87
  %v176 = vmul.f32 %v174, %v88
  %v177 = vstv %s36
  %v178 = vmul.f32 %v177, %v100
  %v179 = vmul.f32 %v177, %v101
  %v180 = vadd.f32 %v175, %v178
  %v181 = vadd.f32 %v176, %v179
  %v182 = vstv %s37
  %v183 = vmul.f32 %v182, %v113
  %v184 = vmul.f32 %v182, %v114
  %v185 = vadd.f32 %v180, %v183
  %v186 = vadd.f32 %v181, %v184
  %v187 = vstv %s38
  %v188 = vmul.f32 %v187, %v126
  %v189 = vmul.f32 %v187, %v127
  %v190 = vadd.f32 %v185, %v188
  %v191 = vadd.f32 %v186, %v189
  %v192 = vstv %s45
  %v193 = vadd.f32 %v190, %v192
  %v194 = vadd.f32 %v191, %v192
  %v195 = vmax.f32 %v193, 0.0
  %v196 = vmax.f32 %v194, 0.0
  %v197 = vstv %s39
  %v198 = vmul.f32 %v197, %v87
  %v199 = vmul.f32 %v197, %v88
  %v200 = vstv %s40
  %v201 = vmul.f32 %v200, %v100
  %v202 = vmul.f32 %v200, %v101
  %v203 = vadd.f32 %v198, %v201
  %v204 = vadd.f32 %v199, %v202
  %v205 = vstv %s41
  %v206 = vmul.f32 %v205, %v113
  %v207 = vmul.f32 %v205, %v114
  %v208 = vadd.f32 %v203, %v206
  %v209 = vadd.f32 %v204, %v207
  %v210 = vstv %s42
  %v211 = vmul.f32 %v210, %v126
  %v212 = vmul.f32 %v210, %v127
  %v213 = vadd.f32 %v208, %v211
  %v214 = vadd.f32 %v209, %v212
  %v215 = vstv %s46
  %v216 = vadd.f32 %v213, %v215
  %v217 = vadd.f32 %v214, %v215
  %v218 = vmax.f32 %v216, 0.0
  %v219 = vmax.f32 %v217, 0.0
  %v220 = vstv %s47
  %v221 = vmul.f32 %v220, %v149
  %v222 = vmul.f32 %v220, %v150
  %v223 = vstv %s48
  %v224 = vmul.f32 %v223, %v172
  %v225 = vmul.f32 %v223, %v173
  %v226 = vadd.f32 %v221, %v224
  %v227 = vadd.f32 %v222, %v225
  %v228 = vstv %s49
  %v229 = vmul.f32 %v228, %v195
  %v230 = vmul.f32 %v228, %v196
  %v231 = vadd.f32 %v226, %v229
  %v232 = vadd.f32 %v227, %v230
  %v233 = vstv %s50
  %v234 = vmul.f32 %v233, %v218
  %v235 = vmul.f32 %v233, %v219
  %v236 = vadd.f32 %v231, %v234
  %v237 = vadd.f32 %v232, %v235
  %v238 = vstv %s63
  %v239 = vadd.f32 %v236, %v238
  %v240 = vadd.f32 %v237, %v238
  %v241 = vmax.f32 %v239, 0.0
  %v242 = vmax.f32 %v240, 0.0
  %v243 = vstv %s51
  %v244 = vmul.f32 %v243, %v149
  %v245 = vmul.f32 %v243, %v150
  %v246 = vstv %s52
  %v247 = vmul.f32 %v246, %v172
  %v248 = vmul.f32 %v246, %v173
  %v249 = vadd.f32 %v244, %v247
  %v250 = vadd.f32 %v245, %v248
  %v251 = vstv %s53
  %v252 = vmul.f32 %v251, %v195
  %v253 = vmul.f32 %v251, %v196
  %v254 = vadd.f32 %v249, %v252
  %v255 = vadd.f32 %v250, %v253
  %v256 = vstv %s54
  %v257 = vmul.f32 %v256, %v218
  %v258 = vmul.f32 %v256, %v219
  %v259 = vadd.f32 %v254, %v257
  %v260 = vadd.f32 %v255, %v258
  %v261 = vstv %s64
  %v262 = vadd.f32 %v259, %v261
  %v263 = vadd.f32 %v260, %v261
  %v264 = vmax.f32 %v262, 0.0
  %v265 = vmax.f32 %v263, 0.0
  %v266 = vstv %s55
  %v267 = vmul.f32 %v266, %v149
  %v268 = vmul.f32 %v266, %v150
  %v269 = vstv %s56
  %v270 = vmul.f32 %v269, %v172
  %v271 = vmul.f32 %v269, %v173
  %v272 = vadd.f32 %v267, %v270
  %v273 = vadd.f32 %v268, %v271
  %v274 = vstv %s57
  %v275 = vmul.f32 %v274, %v195
  %v276 = vmul.f32 %v274, %v196
  %v277 = vadd.f32 %v272, %v275
  %v278 = vadd.f32 %v273, %v276
  %v279 = vstv %s58
  %v280 = vmul.f32 %v279, %v218
  %v281 = vmul.f32 %v279, %v219
  %v282 = vadd.f32 %v277, %v280
  %v283 = vadd.f32 %v278, %v281
  %v284 = vstv %s65
  %v285 = vadd.f32 %v282, %v284
  %v286 = vadd.f32 %v283, %v284
  %v287 = vmax.f32 %v285, 0.0
  %v288 = vmax.f32 %v286, 0.0
  %v289 = vstv %s59
  %v290 = vmul.f32 %v289, %v149
  %v291 = vmul.f32 %v289, %v150
  %v292 = vstv %s60
  %v293 = vmul.f32 %v292, %v172
  %v294 = vmul.f32 %v292, %v173
  %v295 = vadd.f32 %v290, %v293
  %v296 = vadd.f32 %v291, %v294
  %v297 = vstv %s61
  %v298 = vmul.f32 %v297, %v195
  %v299 = vmul.f32 %v297, %v196
  %v300 = vadd.f32 %v295, %v298
  %v301 = vadd.f32 %v296, %v299
  %v302 = vstv %s62
  %v303 = vmul.f32 %v302, %v218
  %v304 = vmul.f32 %v302, %v219
  %v305 = vadd.f32 %v300, %v303
  %v306 = vadd.f32 %v301, %v304
  %v307 = vstv %s66
  %v308 = vadd.f32 %v305, %v307
  %v309 = vadd.f32 %v306, %v307
  %v310 = vmax.f32 %v308, 0.0
  %v311 = vmax.f32 %v309, 0.0
  %v312 = vstv %s67
  %v313 = vmul.f32 %v312, %v241
  %v314 = vmul.f32 %v312, %v242
  %v315 = vstv %s68
  %v316 = vmul.f32 %v315, %v264
  %v317 = vmul.f32 %v315, %v265
  %v318 = vadd.f32 %v313, %v316
  %v319 = vadd.f32 %v314, %v317
  %v320 = vstv %s69
  %v321 = vmul.f32 %v320, %v287
  %v322 = vmul.f32 %v320, %v288
  %v323 = vadd.f32 %v318, %v321
  %v324 = vadd.f32 %v319, %v322
  %v325 = vstv %s70
  %v326 = vmul.f32 %v325, %v310
  %v327 = vmul.f32 %v325, %v311
  %v328 = vadd.f32 %v323, %v326
  %v329 = vadd.f32 %v324, %v327
  %v330 = vstv %s71
  %v331 = vadd.f32 %v328, %v330
  %v332 = vadd.f32 %v329, %v330
  %v333 = vtanh.pop %v331
  %v334 = vtanh.pop %v332
  %335 = vst [vmem:[%s2] sm:$0xff] %v333
  %336 = vst [vmem:[%s2 + $0x8] sm:$0xff] %v334
  // Predicated region
  $region6: #{_forward_packed.1} parent=0 // pred_check
    _
  $region7: #{_forward_packed.1} parent=0 // pred_check_branch
    %338 = sbr.rel (0) target = $region9
  $region8: #{_forward_packed.1} parent=0 // pred_region
    _
  $region9: #{_forward_packed.1} parent=0 // pred_fallthru
    _
  // Predicated region
  $region10: #{_forward_packed.1} parent=0 // pred_check
    _
  $region11: #{_forward_packed.1} parent=0 // pred_check_branch
    %340 = sbr.rel (0) target = $region13
  $region12: #{_forward_packed.1} parent=0 // pred_region
    _
  $region13: #{_forward_packed.1} parent=0 // pred_fallthru
    _

</llo_original>
